<compile_context>
chip_gen: v7x
topology: tpu7x:2x2x1
jax: 0.10.0
libtpu: 0.0.40
codegen_flags: <defaults>
</compile_context>

<pallas_src>
import jax
import jax.numpy as jnp
from jax.experimental import pallas as pl
from jax.experimental.pallas import tpu as pltpu


def mlp_kernel(x_ref,
               w1_ref, b1_ref,
               w2_ref, b2_ref,
               w3_ref, b3_ref,
               w4_ref, b4_ref,
               o_ref):
    """Fused 4-layer MLP on one (TILE_B, 16) batch tile.

    Weights may be f32 or bf16; accumulation is always f32 via
    preferred_element_type.  Bias add and ReLU stay in f32 (VPU).
    """
    wdt = w1_ref.dtype
    x = x_ref[...].astype(wdt)  # in-kernel cast: no wrapper-side extra HBM pass

    h = jnp.dot(x, w1_ref[...], preferred_element_type=jnp.float32) + b1_ref[...]
    h = jnp.maximum(h, 0.0)

    h = jnp.dot(h.astype(wdt), w2_ref[...],
                preferred_element_type=jnp.float32) + b2_ref[...]
    h = jnp.maximum(h, 0.0)

    h = jnp.dot(h.astype(wdt), w3_ref[...],
                preferred_element_type=jnp.float32) + b3_ref[...]
    h = jnp.maximum(h, 0.0)

    h = jnp.dot(h.astype(wdt), w4_ref[...],
                preferred_element_type=jnp.float32) + b4_ref[...]

    o_ref[...] = h.astype(o_ref.dtype)


def _round_up(a, m):
    return ((a + m - 1) // m) * m


def mlp_forward(x, params, *, tile_b=2048, use_bf16=False,
                out_dtype=jnp.float32):
    """x: (B, 16) float32. params: list of (W, b) with W=(in,out), b=(1,out).

    Returns (B, 26) logits in `out_dtype` (default float32).
    """
    (w1, b1), (w2, b2), (w3, b3), (w4, b4) = params
    B, in_dim = x.shape
    out_dim = w4.shape[1]  # 26

    # Batch tile: multiple of 8 sublanes, no larger than the (rounded) batch,
    # and at least two tiles when B > 8 so both v7x TensorCores get work.
    tile_b = max(8, min(int(tile_b), _round_up(B, 8)))
    tile_b = _round_up(tile_b, 8)
    if B > 8 and pl.cdiv(B, tile_b) < 2:
        tile_b = _round_up(pl.cdiv(B, 2), 8)
    grid = (pl.cdiv(B, tile_b),)

    # Weights may be bf16 (MXU-native on v5e/v6e/v7x); biases stay f32 and are
    # added to the f32 accumulator.  x is NOT pre-cast in the wrapper.
    weight_dtype = jnp.bfloat16 if use_bf16 else jnp.float32
    w1c, w2c, w3c, w4c = (w.astype(weight_dtype) for w in (w1, w2, w3, w4))

    # Weights/biases stay VMEM-resident across grid steps (constant index_map);
    # only the x tile and output tile stream per step.
    def resident(arr):
        return pl.BlockSpec(arr.shape, lambda i: (0, 0))

    in_specs = [
        pl.BlockSpec((tile_b, in_dim), lambda i: (i, 0)),  # x tile (streamed)
        resident(w1c), resident(b1),
        resident(w2c), resident(b2),
        resident(w3c), resident(b3),
        resident(w4c), resident(b4),
    ]
    out_specs = pl.BlockSpec((tile_b, out_dim), lambda i: (i, 0))

    out_itemsize = jnp.dtype(out_dtype).itemsize

    # Advisory cost estimate with the real output width / dtypes.
    flops = 2 * B * (w1.shape[0] * w1.shape[1] + w2.shape[0] * w2.shape[1]
                     + w3.shape[0] * w3.shape[1] + w4.shape[0] * w4.shape[1])
    bytes_accessed = (
        x.size * x.dtype.itemsize
        + sum(a.size * a.dtype.itemsize
              for a in (w1c, b1, w2c, b2, w3c, b3, w4c, b4))
        + B * out_dim * out_itemsize)

    # Rough VMEM footprint (lane dim pads to 128; x/out double-buffered, four
    # f32 intermediates).  Only set an explicit limit for very large tiles —
    # v5e's scoped default is 16 MiB, v7x physical VMEM is 64 MiB (cap 48 MiB).
    vmem_est = tile_b * (2 * 128 * 4 + 2 * 128 * out_itemsize + 4 * 128 * 4)
    vmem_est += 1 << 20  # weights/biases + slack
    cparams = dict(dimension_semantics=("parallel",))
    if vmem_est > 12 * (1 << 20):
        cparams["vmem_limit_bytes"] = int(min(vmem_est + (4 << 20),
                                              48 * (1 << 20)))

    out = pl.pallas_call(
        mlp_kernel,
        out_shape=jax.ShapeDtypeStruct((B, out_dim), out_dtype),
        grid=grid,
        in_specs=in_specs,
        out_specs=out_specs,
        compiler_params=pltpu.CompilerParams(**cparams),
        cost_estimate=pl.CostEstimate(
            flops=flops, transcendentals=0, bytes_accessed=bytes_accessed),
    )(x, w1c, b1, w2c, b2, w3c, b3, w4c, b4)

    return out


def init_params(key):
    """Deterministic init mirroring torch.nn.Linear shapes (stored as (in,out))."""
    dims = [(16, 32), (32, 64), (64, 32), (32, 26)]
    params = []
    for (fan_in, fan_out) in dims:
        key, kw, kb = jax.random.split(key, 3)
        bound = 1.0 / jnp.sqrt(fan_in)
        w = jax.random.uniform(kw, (fan_in, fan_out), jnp.float32, -bound, bound)
        b = jax.random.uniform(kb, (1, fan_out), jnp.float32, -bound, bound)
        params.append((w, b))
    return params


def reference_forward(x, params):
    h = x
    for i, (w, b) in enumerate(params):
        h = h @ w + b
        if i < len(params) - 1:
            h = jnp.maximum(h, 0.0)
    return h


if __name__ == "__main__":
    key = jax.random.PRNGKey(0)
    key, kx1, kx2 = jax.random.split(key, 3)
    params = init_params(key)

    # Small-shape test consistent with the module (batch=8, features=16).
    B = 8
    x = jax.random.normal(kx1, (B, 16), jnp.float32)
    out = mlp_forward(x, params)
    jax.block_until_ready(out)
    ref = reference_forward(x, params)
    assert out.shape == (B, 26), out.shape
    assert jnp.allclose(out, ref, atol=1e-5, rtol=1e-5), "f32 mismatch vs reference"

    # Batch grid + ragged (masked partial) last tile, no wrapper-side padding.
    B2 = 100
    x2 = jax.random.normal(kx2, (B2, 16), jnp.float32)
    out2 = mlp_forward(x2, params, tile_b=64)
    jax.block_until_ready(out2)
    ref2 = reference_forward(x2, params)
    assert out2.shape == (B2, 26), out2.shape
    assert jnp.allclose(out2, ref2, atol=1e-5, rtol=1e-5), "gridded f32 mismatch"

    # Default (large-tile) path: tile clamps to >=2 tiles for megacore.
    out2b = mlp_forward(x2, params)
    jax.block_until_ready(out2b)
    assert jnp.allclose(out2b, ref2, atol=1e-5, rtol=1e-5), "default-tile mismatch"

    # bf16 weight path (MXU-native on v5e/v6e/v7x) — looser tolerance because
    # activations are quantized between layers.
    out_bf16 = mlp_forward(x2, params, tile_b=64, use_bf16=True)
    jax.block_until_ready(out_bf16)
    assert jnp.allclose(out_bf16, ref2, atol=1e-1, rtol=1e-1), "bf16 weight mismatch"

    # bf16 output path (halved writeback); compute stays f32.
    out_bf16o = mlp_forward(x2, params, tile_b=64, out_dtype=jnp.bfloat16)
    jax.block_until_ready(out_bf16o)
    assert out_bf16o.dtype == jnp.bfloat16
    assert jnp.allclose(out_bf16o.astype(jnp.float32), ref2,
                        atol=1e-1, rtol=1e-1), "bf16 output mismatch"

    print("KERNEL_OK")
</pallas_src>

<mosaic_0001>
module attributes {stable_mosaic.version = 11 : i64} {
  func.func @mlp_kernel(%arg0: i32, %arg1: memref<8x16xf32, #tpu.memory_space<vmem>>, %arg2: memref<16x32xf32, #tpu.memory_space<vmem>>, %arg3: memref<1x32xf32, #tpu.memory_space<vmem>>, %arg4: memref<32x64xf32, #tpu.memory_space<vmem>>, %arg5: memref<1x64xf32, #tpu.memory_space<vmem>>, %arg6: memref<64x32xf32, #tpu.memory_space<vmem>>, %arg7: memref<1x32xf32, #tpu.memory_space<vmem>>, %arg8: memref<32x26xf32, #tpu.memory_space<vmem>>, %arg9: memref<1x26xf32, #tpu.memory_space<vmem>>, %arg10: memref<8x26xf32, #tpu.memory_space<vmem>>) attributes {dimension_semantics = [#tpu.dimension_semantics<parallel>], iteration_bounds = array<i64: 1>, scalar_prefetch = 0 : i64, scratch_operands = 0 : i64, tpu.core_type = #tpu.core_type<tc>, window_params = [{transform_indices = @transform_0, window_bounds = array<i64: 8, 16>}, {pipeline_mode = #tpu.pipeline_mode<synchronous>, transform_indices = @transform_1, window_bounds = array<i64: 16, 32>}, {pipeline_mode = #tpu.pipeline_mode<synchronous>, transform_indices = @transform_2, window_bounds = array<i64: 1, 32>}, {pipeline_mode = #tpu.pipeline_mode<synchronous>, transform_indices = @transform_3, window_bounds = array<i64: 32, 64>}, {pipeline_mode = #tpu.pipeline_mode<synchronous>, transform_indices = @transform_4, window_bounds = array<i64: 1, 64>}, {pipeline_mode = #tpu.pipeline_mode<synchronous>, transform_indices = @transform_5, window_bounds = array<i64: 64, 32>}, {pipeline_mode = #tpu.pipeline_mode<synchronous>, transform_indices = @transform_6, window_bounds = array<i64: 1, 32>}, {pipeline_mode = #tpu.pipeline_mode<synchronous>, transform_indices = @transform_7, window_bounds = array<i64: 32, 26>}, {pipeline_mode = #tpu.pipeline_mode<synchronous>, transform_indices = @transform_8, window_bounds = array<i64: 1, 26>}, {transform_indices = @transform_9, window_bounds = array<i64: 8, 26>}]} {
    %c0 = arith.constant 0 : index
    %c0_0 = arith.constant 0 : index
    %0 = vector.load %arg1[%c0, %c0_0] : memref<8x16xf32, #tpu.memory_space<vmem>>, vector<8x16xf32>
    %c0_1 = arith.constant 0 : index
    %c0_2 = arith.constant 0 : index
    %1 = vector.load %arg2[%c0_1, %c0_2] : memref<16x32xf32, #tpu.memory_space<vmem>>, vector<16x32xf32>
    %cst = arith.constant dense<0.000000e+00> : vector<8x32xf32>
    %2 = tpu.matmul %0, %1, %cst {dimension_numbers = #tpu.dot_dimension_numbers<[1], [0], [0], [1], [0, 0, 1, 1], [], []>} : vector<8x16xf32>, vector<16x32xf32>, vector<8x32xf32> -> vector<8x32xf32>
    %c0_3 = arith.constant 0 : index
    %c0_4 = arith.constant 0 : index
    %3 = vector.load %arg3[%c0_3, %c0_4] : memref<1x32xf32, #tpu.memory_space<vmem>>, vector<1x32xf32>
    %4 = vector.broadcast %3 : vector<1x32xf32> to vector<8x32xf32>
    %5 = arith.addf %2, %4 : vector<8x32xf32>
    %cst_5 = arith.constant 0.000000e+00 : f32
    %6 = vector.broadcast %cst_5 : f32 to vector<8x32xf32>
    %7 = arith.maximumf %5, %6 : vector<8x32xf32>
    %c0_6 = arith.constant 0 : index
    %c0_7 = arith.constant 0 : index
    %8 = vector.load %arg4[%c0_6, %c0_7] : memref<32x64xf32, #tpu.memory_space<vmem>>, vector<32x64xf32>
    %cst_8 = arith.constant dense<0.000000e+00> : vector<8x64xf32>
    %9 = tpu.matmul %7, %8, %cst_8 {dimension_numbers = #tpu.dot_dimension_numbers<[1], [0], [0], [1], [0, 0, 1, 1], [], []>} : vector<8x32xf32>, vector<32x64xf32>, vector<8x64xf32> -> vector<8x64xf32>
    %c0_9 = arith.constant 0 : index
    %c0_10 = arith.constant 0 : index
    %10 = vector.load %arg5[%c0_9, %c0_10] : memref<1x64xf32, #tpu.memory_space<vmem>>, vector<1x64xf32>
    %11 = vector.broadcast %10 : vector<1x64xf32> to vector<8x64xf32>
    %12 = arith.addf %9, %11 : vector<8x64xf32>
    %cst_11 = arith.constant 0.000000e+00 : f32
    %13 = vector.broadcast %cst_11 : f32 to vector<8x64xf32>
    %14 = arith.maximumf %12, %13 : vector<8x64xf32>
    %c0_12 = arith.constant 0 : index
    %c0_13 = arith.constant 0 : index
    %15 = vector.load %arg6[%c0_12, %c0_13] : memref<64x32xf32, #tpu.memory_space<vmem>>, vector<64x32xf32>
    %cst_14 = arith.constant dense<0.000000e+00> : vector<8x32xf32>
    %16 = tpu.matmul %14, %15, %cst_14 {dimension_numbers = #tpu.dot_dimension_numbers<[1], [0], [0], [1], [0, 0, 1, 1], [], []>} : vector<8x64xf32>, vector<64x32xf32>, vector<8x32xf32> -> vector<8x32xf32>
    %c0_15 = arith.constant 0 : index
    %c0_16 = arith.constant 0 : index
    %17 = vector.load %arg7[%c0_15, %c0_16] : memref<1x32xf32, #tpu.memory_space<vmem>>, vector<1x32xf32>
    %18 = vector.broadcast %17 : vector<1x32xf32> to vector<8x32xf32>
    %19 = arith.addf %16, %18 : vector<8x32xf32>
    %cst_17 = arith.constant 0.000000e+00 : f32
    %20 = vector.broadcast %cst_17 : f32 to vector<8x32xf32>
    %21 = arith.maximumf %19, %20 : vector<8x32xf32>
    %c0_18 = arith.constant 0 : index
    %c0_19 = arith.constant 0 : index
    %22 = vector.load %arg8[%c0_18, %c0_19] : memref<32x26xf32, #tpu.memory_space<vmem>>, vector<32x26xf32>
    %cst_20 = arith.constant dense<0.000000e+00> : vector<8x26xf32>
    %23 = tpu.matmul %21, %22, %cst_20 {dimension_numbers = #tpu.dot_dimension_numbers<[1], [0], [0], [1], [0, 0, 1, 1], [], []>} : vector<8x32xf32>, vector<32x26xf32>, vector<8x26xf32> -> vector<8x26xf32>
    %c0_21 = arith.constant 0 : index
    %c0_22 = arith.constant 0 : index
    %24 = vector.load %arg9[%c0_21, %c0_22] : memref<1x26xf32, #tpu.memory_space<vmem>>, vector<1x26xf32>
    %25 = vector.broadcast %24 : vector<1x26xf32> to vector<8x26xf32>
    %26 = arith.addf %23, %25 : vector<8x26xf32>
    %c0_23 = arith.constant 0 : index
    %c0_24 = arith.constant 0 : index
    %27 = vector.load %arg10[%c0_23, %c0_24] : memref<8x26xf32, #tpu.memory_space<vmem>>, vector<8x26xf32>
    tpu.vector_store %arg10[%c0_23, %c0_24], %26 {strides = array<i32>} : memref<8x26xf32, #tpu.memory_space<vmem>>, vector<8x26xf32>,
    return
  }
  func.func @transform_0(%arg0: i32) -> (i32, i32) {
    %c0_i32 = arith.constant 0 : i32
    %c0_i32_0 = arith.constant 0 : i32
    return %arg0, %c0_i32 : i32, i32
  }
  func.func @transform_1(%arg0: i32) -> (i32, i32) {
    %c0_i32 = arith.constant 0 : i32
    %c0_i32_0 = arith.constant 0 : i32
    %c0_i32_1 = arith.constant 0 : i32
    return %c0_i32, %c0_i32_0 : i32, i32
  }
  func.func @transform_2(%arg0: i32) -> (i32, i32) {
    %c0_i32 = arith.constant 0 : i32
    %c0_i32_0 = arith.constant 0 : i32
    %c0_i32_1 = arith.constant 0 : i32
    return %c0_i32, %c0_i32_0 : i32, i32
  }
  func.func @transform_3(%arg0: i32) -> (i32, i32) {
    %c0_i32 = arith.constant 0 : i32
    %c0_i32_0 = arith.constant 0 : i32
    %c0_i32_1 = arith.constant 0 : i32
    return %c0_i32, %c0_i32_0 : i32, i32
  }
  func.func @transform_4(%arg0: i32) -> (i32, i32) {
    %c0_i32 = arith.constant 0 : i32
    %c0_i32_0 = arith.constant 0 : i32
    %c0_i32_1 = arith.constant 0 : i32
    return %c0_i32, %c0_i32_0 : i32, i32
  }
  func.func @transform_5(%arg0: i32) -> (i32, i32) {
    %c0_i32 = arith.constant 0 : i32
    %c0_i32_0 = arith.constant 0 : i32
    %c0_i32_1 = arith.constant 0 : i32
    return %c0_i32, %c0_i32_0 : i32, i32
  }
  func.func @transform_6(%arg0: i32) -> (i32, i32) {
    %c0_i32 = arith.constant 0 : i32
    %c0_i32_0 = arith.constant 0 : i32
    %c0_i32_1 = arith.constant 0 : i32
    return %c0_i32, %c0_i32_0 : i32, i32
  }
  func.func @transform_7(%arg0: i32) -> (i32, i32) {
    %c0_i32 = arith.constant 0 : i32
    %c0_i32_0 = arith.constant 0 : i32
    %c0_i32_1 = arith.constant 0 : i32
    return %c0_i32, %c0_i32_0 : i32, i32
  }
  func.func @transform_8(%arg0: i32) -> (i32, i32) {
    %c0_i32 = arith.constant 0 : i32
    %c0_i32_0 = arith.constant 0 : i32
    %c0_i32_1 = arith.constant 0 : i32
    return %c0_i32, %c0_i32_0 : i32, i32
  }
  func.func @transform_9(%arg0: i32) -> (i32, i32) {
    %c0_i32 = arith.constant 0 : i32
    %c0_i32_0 = arith.constant 0 : i32
    return %arg0, %c0_i32 : i32, i32
  }
}

</mosaic_0001>

<llo_original>
// kernel: tpu_custom_call.1
$region0: #{tpu_custom_call.1}
  #allocation0 [shape = 'u32[]', space=smem, size = 0x4, offset = 0x4, fixed_abs, tag = 'smem constant byte address 0x4 - core index']
  #allocation1 [shape = 'u32[144,128]{1,0:T(1,128)}', space=vmem, size = 0x12000, scoped, tag = 'internal scratch']
  %s0 = inlined_call_operand.vmem [shape: f32[8,16], index: 0, kind: input, shape index: {}]
  %s1 = inlined_call_operand.vmem [shape: f32[16,32], index: 1, kind: input, shape index: {}]
  %s2 = inlined_call_operand.vmem [shape: f32[1,32], index: 2, kind: input, shape index: {}]
  %s3 = inlined_call_operand.vmem [shape: f32[32,64], index: 3, kind: input, shape index: {}]
  %s4 = inlined_call_operand.vmem [shape: f32[1,64], index: 4, kind: input, shape index: {}]
  %s5 = inlined_call_operand.vmem [shape: f32[64,32], index: 5, kind: input, shape index: {}]
  %s6 = inlined_call_operand.vmem [shape: f32[1,32], index: 6, kind: input, shape index: {}]
  %s7 = inlined_call_operand.vmem [shape: f32[32,26], index: 7, kind: input, shape index: {}]
  %s8 = inlined_call_operand.vmem [shape: f32[1,26], index: 8, kind: input, shape index: {}]
  %s9 = inlined_call_operand.hbm [shape: f32[8,26], index: 9, kind: output, shape index: {}]
  %s10 = sld [smem:[#allocation0]]
  $region46: #{tpu_custom_call.1} parent=0
    _
  %s12 = ssub.s32 1, %s10
  %s13 = scalar_select 0, %s12, %s10
  $region1: #{tpu_custom_call.1} parent=0
    #allocation2 [shape = 'u8[4096]{0}', space=vmem, size = 0x1000, scoped, tag = 'output window, operand 0, single buffered']
    #allocation3 [shape = 's32[1]{0}', space=sflag, size = 0x4, scoped, tag = 'scoped memory for tpu_custom_call.1']
    %14 = vsyncpa [#allocation3], 0
    // Predicated region
    $region2: #{tpu_custom_call.1} parent=1 // pred_check
      _
    $region3: #{tpu_custom_call.1} parent=1 // pred_check_branch
      %16 = sbr.rel (0) target = $region5
    $region4: #{tpu_custom_call.1} parent=1 // pred_region
      _
    $region5: #{tpu_custom_call.1} parent=1 // pred_fallthru
      _
    // Predicated region
    $region6: #{tpu_custom_call.1} parent=1 // pred_check
      _
    $region7: #{tpu_custom_call.1} parent=1 // pred_check_branch
      %18 = sbr.rel (0) target = $region9
    $region8: #{tpu_custom_call.1} parent=1 // pred_region
      _
    $region9: #{tpu_custom_call.1} parent=1 // pred_fallthru
      _
    // Predicated region
    $region10: #{tpu_custom_call.1} parent=1 // pred_check
      _
    $region11: #{tpu_custom_call.1} parent=1 // pred_check_branch
      %20 = sbr.rel (0) target = $region13
    $region12: #{tpu_custom_call.1} parent=1 // pred_region
      _
    $region13: #{tpu_custom_call.1} parent=1 // pred_fallthru
      _
    // Predicated region
    $region14: #{tpu_custom_call.1} parent=1 // pred_check
      _
    $region15: #{tpu_custom_call.1} parent=1 // pred_check_branch
      %22 = sbr.rel (0) target = $region17
    $region16: #{tpu_custom_call.1} parent=1 // pred_region
      _
    $region17: #{tpu_custom_call.1} parent=1 // pred_fallthru
      _
    // Predicated region
    $region18: #{tpu_custom_call.1} parent=1 // pred_check
      _
    $region19: #{tpu_custom_call.1} parent=1 // pred_check_branch
      %24 = sbr.rel (0) target = $region21
    $region20: #{tpu_custom_call.1} parent=1 // pred_region
      _
    $region21: #{tpu_custom_call.1} parent=1 // pred_fallthru
      _
    // Predicated region
    $region22: #{tpu_custom_call.1} parent=1 // pred_check
      _
    $region23: #{tpu_custom_call.1} parent=1 // pred_check_branch
      %26 = sbr.rel (0) target = $region25
    $region24: #{tpu_custom_call.1} parent=1 // pred_region
      _
    $region25: #{tpu_custom_call.1} parent=1 // pred_fallthru
      _
    // Predicated region
    $region26: #{tpu_custom_call.1} parent=1 // pred_check
      _
    $region27: #{tpu_custom_call.1} parent=1 // pred_check_branch
      %28 = sbr.rel (0) target = $region29
    $region28: #{tpu_custom_call.1} parent=1 // pred_region
      _
    $region29: #{tpu_custom_call.1} parent=1 // pred_fallthru
      _
    // Predicated region
    $region30: #{tpu_custom_call.1} parent=1 // pred_check
      _
    $region31: #{tpu_custom_call.1} parent=1 // pred_check_branch
      %30 = sbr.rel (0) target = $region33
    $region32: #{tpu_custom_call.1} parent=1 // pred_region
      _
    $region33: #{tpu_custom_call.1} parent=1 // pred_fallthru
      _
    // Predicated region
    $region34: #{tpu_custom_call.1} parent=1 // pred_check
      _
    $region35: #{tpu_custom_call.1} parent=1 // pred_check_branch
      %32 = sbr.rel (0) target = $region37
    $region36: #{tpu_custom_call.1} parent=1 // pred_region
      _
    $region37: #{tpu_custom_call.1} parent=1 // pred_fallthru
      _
    %v33 = vld [vmem:[%s0] sm:$0xff]
    %v34 = vld [vmem:[%s1] sm:$0xff]
    %v35 = vld [vmem:[%s1 + $0x8] sm:$0xff]
    %v36 = vld [vmem:[%s2] sm:$0x1]
    %v38 = vlaneseq
    %v39 = vshrl.u32 %v38, 7
    %v40 = vsub.s32 0, %v39
    %v41 = vrot.slane %v36, %v40
    %vm43 = vcmask 130048
    %v45 = vsel %vm43, %v33, 0
    %47 = vmatprep.subr.mxu0 0.0
    %48 = vmatpush1.msra.mxu0 %v34
    %49 = vmatprep.subr.mxu0 0.0
    %50 = vmatpush1.msra.mxu0 %v35
    %51 = vmatprep.subr.mxu0 0.0
    %52 = vmatpush1.msra.mxu0 0.0
    %53 = vmatprep.subr.mxu0 0.0
    %54 = vmatpush1.msra.mxu0 0.0
    %55 = vmatprep.subr.mxu0 0.0
    %56 = vmatpush1.msra.mxu0 0.0
    %57 = vmatprep.subr.mxu0 0.0
    %58 = vmatpush1.msra.mxu0 0.0
    %59 = vmatprep.subr.mxu0 0.0
    %60 = vmatpush1.msra.mxu0 0.0
    %61 = vmatprep.subr.mxu0 0.0
    %62 = vmatpush1.msra.mxu0 0.0
    %63 = vmatprep.subr.mxu0 0.0
    %64 = vmatpush1.msra.mxu0 0.0
    %65 = vmatprep.subr.mxu0 0.0
    %66 = vmatpush1.msra.mxu0 0.0
    %67 = vmatprep.subr.mxu0 0.0
    %68 = vmatpush1.msra.mxu0 0.0
    %69 = vmatprep.subr.mxu0 0.0
    %70 = vmatpush1.msra.mxu0 0.0
    %71 = vmatprep.subr.mxu0 0.0
    %72 = vmatpush1.msra.mxu0 0.0
    %73 = vmatprep.subr.mxu0 0.0
    %74 = vmatpush1.msra.mxu0 0.0
    %75 = vmatprep.subr.mxu0 0.0
    %76 = vmatpush1.msra.mxu0 0.0
    %77 = vmatprep.subr.mxu0 0.0
    %78 = vmatpush1.msra.mxu0 0.0
    %79 = vmatprep.subr.mxu0 0.0
    %80 = vmatpush1.msra.mxu0 0.0
    %81 = vmatprep.subr.mxu0 0.0
    %82 = vmatpush1.msra.mxu0 0.0
    %83 = vmatprep.subr.mxu0 0.0
    %84 = vmatpush1.msra.mxu0 0.0
    %85 = vmatprep.subr.mxu0 0.0
    %86 = vmatpush1.msra.mxu0 0.0
    %87 = vmatprep.subr.mxu0 0.0
    %88 = vmatpush1.msra.mxu0 0.0
    %89 = vmatprep.subr.mxu0 0.0
    %90 = vmatpush1.msra.mxu0 0.0
    %91 = vmatprep.subr.mxu0 0.0
    %92 = vmatpush1.msra.mxu0 0.0
    %93 = vmatprep.subr.mxu0 0.0
    %94 = vmatpush1.msra.mxu0 0.0
    %95 = vmatprep.subr.mxu0 0.0
    %96 = vmatpush1.msra.mxu0 0.0
    %97 = vmatprep.subr.mxu0 0.0
    %98 = vmatpush1.msra.mxu0 0.0
    %99 = vmatprep.subr.mxu0 0.0
    %100 = vmatpush1.msra.mxu0 0.0
    %101 = vmatprep.subr.mxu0 0.0
    %102 = vmatpush1.msra.mxu0 0.0
    %103 = vmatprep.subr.mxu0 0.0
    %104 = vmatpush1.msra.mxu0 0.0
    %105 = vmatprep.subr.mxu0 0.0
    %106 = vmatpush1.msra.mxu0 0.0
    %107 = vmatprep.subr.mxu0 0.0
    %108 = vmatpush1.msra.mxu0 0.0
    %109 = vmatprep.subr.mxu0 0.0
    %110 = vmatpush1.msra.mxu0 0.0
    %111 = vmatprep.mubr.f32.mxu0 0.0
    %112 = vmatmul.mubr.f32.gmra.mrb[0].mxu0 %v45
    %v113 = vpop.f32.mrb[0].mxu0
    %v114 = vadd.f32 %v41, %v113
    %v115 = vpop.f32.mrb[0].mxu0
    %116 = vdwg.mxu0
    %v117 = vmax.f32 %v114, 0.0
    %v118 = vld [vmem:[%s3] sm:$0xff]
    %v119 = vld [vmem:[%s3 + $0x8] sm:$0xff]
    %v120 = vld [vmem:[%s3 + $0x10] sm:$0xff]
    %v121 = vld [vmem:[%s3 + $0x18] sm:$0xff]
    %v122 = vld [vmem:[%s4] sm:$0x1]
    %v124 = vlaneseq
    %v125 = vshrl.u32 %v124, 7
    %v126 = vsub.s32 0, %v125
    %v127 = vrot.slane %v122, %v126
    %vm129 = vcmask 261120
    %v131 = vsel %vm129, %v117, 0
    %133 = vmatprep.subr.mxu0 0.0
    %134 = vmatpush1.msra.mxu0 %v118
    %135 = vmatprep.subr.mxu0 0.0
    %136 = vmatpush1.msra.mxu0 %v119
    %137 = vmatprep.subr.mxu0 0.0
    %138 = vmatpush1.msra.mxu0 %v120
    %139 = vmatprep.subr.mxu0 0.0
    %140 = vmatpush1.msra.mxu0 %v121
    %141 = vmatprep.subr.mxu0 0.0
    %142 = vmatpush1.msra.mxu0 0.0
    %143 = vmatprep.subr.mxu0 0.0
    %144 = vmatpush1.msra.mxu0 0.0
    %145 = vmatprep.subr.mxu0 0.0
    %146 = vmatpush1.msra.mxu0 0.0
    %147 = vmatprep.subr.mxu0 0.0
    %148 = vmatpush1.msra.mxu0 0.0
    %149 = vmatprep.subr.mxu0 0.0
    %150 = vmatpush1.msra.mxu0 0.0
    %151 = vmatprep.subr.mxu0 0.0
    %152 = vmatpush1.msra.mxu0 0.0
    %153 = vmatprep.subr.mxu0 0.0
    %154 = vmatpush1.msra.mxu0 0.0
    %155 = vmatprep.subr.mxu0 0.0
    %156 = vmatpush1.msra.mxu0 0.0
    %157 = vmatprep.subr.mxu0 0.0
    %158 = vmatpush1.msra.mxu0 0.0
    %159 = vmatprep.subr.mxu0 0.0
    %160 = vmatpush1.msra.mxu0 0.0
    %161 = vmatprep.subr.mxu0 0.0
    %162 = vmatpush1.msra.mxu0 0.0
    %163 = vmatprep.subr.mxu0 0.0
    %164 = vmatpush1.msra.mxu0 0.0
    %165 = vmatprep.subr.mxu0 0.0
    %166 = vmatpush1.msra.mxu0 0.0
    %167 = vmatprep.subr.mxu0 0.0
    %168 = vmatpush1.msra.mxu0 0.0
    %169 = vmatprep.subr.mxu0 0.0
    %170 = vmatpush1.msra.mxu0 0.0
    %171 = vmatprep.subr.mxu0 0.0
    %172 = vmatpush1.msra.mxu0 0.0
    %173 = vmatprep.subr.mxu0 0.0
    %174 = vmatpush1.msra.mxu0 0.0
    %175 = vmatprep.subr.mxu0 0.0
    %176 = vmatpush1.msra.mxu0 0.0
    %177 = vmatprep.subr.mxu0 0.0
    %178 = vmatpush1.msra.mxu0 0.0
    %179 = vmatprep.subr.mxu0 0.0
    %180 = vmatpush1.msra.mxu0 0.0
    %181 = vmatprep.subr.mxu0 0.0
    %182 = vmatpush1.msra.mxu0 0.0
    %183 = vmatprep.subr.mxu0 0.0
    %184 = vmatpush1.msra.mxu0 0.0
    %185 = vmatprep.subr.mxu0 0.0
    %186 = vmatpush1.msra.mxu0 0.0
    %187 = vmatprep.subr.mxu0 0.0
    %188 = vmatpush1.msra.mxu0 0.0
    %189 = vmatprep.subr.mxu0 0.0
    %190 = vmatpush1.msra.mxu0 0.0
    %191 = vmatprep.subr.mxu0 0.0
    %192 = vmatpush1.msra.mxu0 0.0
    %193 = vmatprep.subr.mxu0 0.0
    %194 = vmatpush1.msra.mxu0 0.0
    %195 = vmatprep.subr.mxu0 0.0
    %196 = vmatpush1.msra.mxu0 0.0
    %197 = vmatprep.mubr.f32.mxu0 0.0
    %198 = vmatmul.mubr.f32.gmra.mrb[0].mxu0 %v131
    %v199 = vpop.f32.mrb[0].mxu0
    %v200 = vadd.f32 %v127, %v199
    %v201 = vpop.f32.mrb[0].mxu0
    %202 = vdwg.mxu0
    %v203 = vmax.f32 %v200, 0.0
    %v204 = vld [vmem:[%s5] sm:$0xff]
    %v205 = vld [vmem:[%s5 + $0x8] sm:$0xff]
    %v206 = vld [vmem:[%s5 + $0x10] sm:$0xff]
    %v207 = vld [vmem:[%s5 + $0x18] sm:$0xff]
    %v208 = vld [vmem:[%s5 + $0x20] sm:$0xff]
    %v209 = vld [vmem:[%s5 + $0x28] sm:$0xff]
    %v210 = vld [vmem:[%s5 + $0x30] sm:$0xff]
    %v211 = vld [vmem:[%s5 + $0x38] sm:$0xff]
    %v212 = vld [vmem:[%s6] sm:$0x1]
    %v214 = vlaneseq
    %v215 = vshrl.u32 %v214, 7
    %v216 = vsub.s32 0, %v215
    %v217 = vrot.slane %v212, %v216
    %vm219 = vcmask 523264
    %v221 = vsel %vm219, %v203, 0
    %223 = vmatprep.subr.mxu0 0.0
    %224 = vmatpush1.msra.mxu0 %v204
    %225 = vmatprep.subr.mxu0 0.0
    %226 = vmatpush1.msra.mxu0 %v205
    %227 = vmatprep.subr.mxu0 0.0
    %228 = vmatpush1.msra.mxu0 %v206
    %229 = vmatprep.subr.mxu0 0.0
    %230 = vmatpush1.msra.mxu0 %v207
    %231 = vmatprep.subr.mxu0 0.0
    %232 = vmatpush1.msra.mxu0 %v208
    %233 = vmatprep.subr.mxu0 0.0
    %234 = vmatpush1.msra.mxu0 %v209
    %235 = vmatprep.subr.mxu0 0.0
    %236 = vmatpush1.msra.mxu0 %v210
    %237 = vmatprep.subr.mxu0 0.0
    %238 = vmatpush1.msra.mxu0 %v211
    %239 = vmatprep.subr.mxu0 0.0
    %240 = vmatpush1.msra.mxu0 0.0
    %241 = vmatprep.subr.mxu0 0.0
    %242 = vmatpush1.msra.mxu0 0.0
    %243 = vmatprep.subr.mxu0 0.0
    %244 = vmatpush1.msra.mxu0 0.0
    %245 = vmatprep.subr.mxu0 0.0
    %246 = vmatpush1.msra.mxu0 0.0
    %247 = vmatprep.subr.mxu0 0.0
    %248 = vmatpush1.msra.mxu0 0.0
    %249 = vmatprep.subr.mxu0 0.0
    %250 = vmatpush1.msra.mxu0 0.0
    %251 = vmatprep.subr.mxu0 0.0
    %252 = vmatpush1.msra.mxu0 0.0
    %253 = vmatprep.subr.mxu0 0.0
    %254 = vmatpush1.msra.mxu0 0.0
    %255 = vmatprep.subr.mxu0 0.0
    %256 = vmatpush1.msra.mxu0 0.0
    %257 = vmatprep.subr.mxu0 0.0
    %258 = vmatpush1.msra.mxu0 0.0
    %259 = vmatprep.subr.mxu0 0.0
    %260 = vmatpush1.msra.mxu0 0.0
    %261 = vmatprep.subr.mxu0 0.0
    %262 = vmatpush1.msra.mxu0 0.0
    %263 = vmatprep.subr.mxu0 0.0
    %264 = vmatpush1.msra.mxu0 0.0
    %265 = vmatprep.subr.mxu0 0.0
    %266 = vmatpush1.msra.mxu0 0.0
    %267 = vmatprep.subr.mxu0 0.0
    %268 = vmatpush1.msra.mxu0 0.0
    %269 = vmatprep.subr.mxu0 0.0
    %270 = vmatpush1.msra.mxu0 0.0
    %271 = vmatprep.subr.mxu0 0.0
    %272 = vmatpush1.msra.mxu0 0.0
    %273 = vmatprep.subr.mxu0 0.0
    %274 = vmatpush1.msra.mxu0 0.0
    %275 = vmatprep.subr.mxu0 0.0
    %276 = vmatpush1.msra.mxu0 0.0
    %277 = vmatprep.subr.mxu0 0.0
    %278 = vmatpush1.msra.mxu0 0.0
    %279 = vmatprep.subr.mxu0 0.0
    %280 = vmatpush1.msra.mxu0 0.0
    %281 = vmatprep.subr.mxu0 0.0
    %282 = vmatpush1.msra.mxu0 0.0
    %283 = vmatprep.subr.mxu0 0.0
    %284 = vmatpush1.msra.mxu0 0.0
    %285 = vmatprep.subr.mxu0 0.0
    %286 = vmatpush1.msra.mxu0 0.0
    %287 = vmatprep.mubr.f32.mxu0 0.0
    %288 = vmatmul.mubr.f32.gmra.mrb[0].mxu0 %v221
    %v289 = vpop.f32.mrb[0].mxu0
    %v290 = vadd.f32 %v217, %v289
    %v291 = vpop.f32.mrb[0].mxu0
    %292 = vdwg.mxu0
    %v293 = vmax.f32 %v290, 0.0
    %v294 = vld [vmem:[%s7] sm:$0xff]
    %v295 = vld [vmem:[%s7 + $0x8] sm:$0xff]
    %v296 = vld [vmem:[%s7 + $0x10] sm:$0xff]
    %v297 = vld [vmem:[%s7 + $0x18] sm:$0xff]
    %v298 = vld [vmem:[%s8] sm:$0x1]
    %v300 = vlaneseq
    %v301 = vshrl.u32 %v300, 7
    %v302 = vsub.s32 0, %v301
    %v303 = vrot.slane %v298, %v302
    %v306 = vsel %vm129, %v293, 0
    %308 = vmatprep.subr.mxu0 0.0
    %309 = vmatpush1.msra.mxu0 %v294
    %310 = vmatprep.subr.mxu0 0.0
    %311 = vmatpush1.msra.mxu0 %v295
    %312 = vmatprep.subr.mxu0 0.0
    %313 = vmatpush1.msra.mxu0 %v296
    %314 = vmatprep.subr.mxu0 0.0
    %315 = vmatpush1.msra.mxu0 %v297
    %316 = vmatprep.subr.mxu0 0.0
    %317 = vmatpush1.msra.mxu0 0.0
    %318 = vmatprep.subr.mxu0 0.0
    %319 = vmatpush1.msra.mxu0 0.0
    %320 = vmatprep.subr.mxu0 0.0
    %321 = vmatpush1.msra.mxu0 0.0
    %322 = vmatprep.subr.mxu0 0.0
    %323 = vmatpush1.msra.mxu0 0.0
    %324 = vmatprep.subr.mxu0 0.0
    %325 = vmatpush1.msra.mxu0 0.0
    %326 = vmatprep.subr.mxu0 0.0
    %327 = vmatpush1.msra.mxu0 0.0
    %328 = vmatprep.subr.mxu0 0.0
    %329 = vmatpush1.msra.mxu0 0.0
    %330 = vmatprep.subr.mxu0 0.0
    %331 = vmatpush1.msra.mxu0 0.0
    %332 = vmatprep.subr.mxu0 0.0
    %333 = vmatpush1.msra.mxu0 0.0
    %334 = vmatprep.subr.mxu0 0.0
    %335 = vmatpush1.msra.mxu0 0.0
    %336 = vmatprep.subr.mxu0 0.0
    %337 = vmatpush1.msra.mxu0 0.0
    %338 = vmatprep.subr.mxu0 0.0
    %339 = vmatpush1.msra.mxu0 0.0
    %340 = vmatprep.subr.mxu0 0.0
    %341 = vmatpush1.msra.mxu0 0.0
    %342 = vmatprep.subr.mxu0 0.0
    %343 = vmatpush1.msra.mxu0 0.0
    %344 = vmatprep.subr.mxu0 0.0
    %345 = vmatpush1.msra.mxu0 0.0
    %346 = vmatprep.subr.mxu0 0.0
    %347 = vmatpush1.msra.mxu0 0.0
    %348 = vmatprep.subr.mxu0 0.0
    %349 = vmatpush1.msra.mxu0 0.0
    %350 = vmatprep.subr.mxu0 0.0
    %351 = vmatpush1.msra.mxu0 0.0
    %352 = vmatprep.subr.mxu0 0.0
    %353 = vmatpush1.msra.mxu0 0.0
    %354 = vmatprep.subr.mxu0 0.0
    %355 = vmatpush1.msra.mxu0 0.0
    %356 = vmatprep.subr.mxu0 0.0
    %357 = vmatpush1.msra.mxu0 0.0
    %358 = vmatprep.subr.mxu0 0.0
    %359 = vmatpush1.msra.mxu0 0.0
    %360 = vmatprep.subr.mxu0 0.0
    %361 = vmatpush1.msra.mxu0 0.0
    %362 = vmatprep.subr.mxu0 0.0
    %363 = vmatpush1.msra.mxu0 0.0
    %364 = vmatprep.subr.mxu0 0.0
    %365 = vmatpush1.msra.mxu0 0.0
    %366 = vmatprep.subr.mxu0 0.0
    %367 = vmatpush1.msra.mxu0 0.0
    %368 = vmatprep.subr.mxu0 0.0
    %369 = vmatpush1.msra.mxu0 0.0
    %370 = vmatprep.subr.mxu0 0.0
    %371 = vmatpush1.msra.mxu0 0.0
    %372 = vmatprep.mubr.f32.mxu0 0.0
    %373 = vmatmul.mubr.f32.gmra.mrb[0].mxu0 %v306
    %v374 = vpop.f32.mrb[0].mxu0
    %v375 = vadd.f32 %v303, %v374
    %v376 = vpop.f32.mrb[0].mxu0
    %377 = vdwg.mxu0
    %vm378 = vcmask 211968
    %379 = vst.msk [vmem:[#allocation2] sm:$0xff] %vm378, %v375
    // Predicated region
    $region38: #{tpu_custom_call.1} parent=1 // pred_check
      _
    $region39: #{tpu_custom_call.1} parent=1 // pred_check_branch
      %381 = sbr.rel (0) target = $region41
    $region40: #{tpu_custom_call.1} parent=1 // pred_region
      %s383 = ssub.s32 128, 128
      %384 = vsyncadd [#allocation3], %s383
      %s386 = sshll.u32 [#allocation2], 4
      %s387 = int_to_ptr.vmem [resolvable:$true] %s386
      %389 = dma.vmem_to_hbm [thread:$0]  %s387, 128, %s9, [#allocation3]
    $region41: #{tpu_custom_call.1} parent=1 // pred_fallthru
      _
    // Predicated region
    $region42: #{tpu_custom_call.1} parent=1 // pred_check
      _
    $region43: #{tpu_custom_call.1} parent=1 // pred_check_branch
      %391 = sbr.rel (0) target = $region45
    $region44: #{tpu_custom_call.1} parent=1 // pred_region
      %392 = dma.done [#allocation3], 128
    $region45: #{tpu_custom_call.1} parent=1 // pred_fallthru
      _
    %393 = vsyncpa [#allocation3], 1

</llo_original>
